<compile_context>
chip_gen: v5e
topology: v5e:2x2
jax: 0.10.0
libtpu: 0.0.40
codegen_flags: <defaults>
</compile_context>

<pallas_src>
import functools
import numpy as np
import jax
import jax.numpy as jnp
from jax import lax
from jax.experimental import pallas as pl
from jax.experimental.pallas import tpu as pltpu


_PAD_MODE = {'refl': 'reflect', 'reflect': 'reflect',
             'repl': 'edge', 'replicate': 'edge',
             'zero': 'zero'}


def _binomial_1d(filt_size):
    """Normalized 1-D binomial taps; outer(a, a) == the reference 2-D filter."""
    taps = {1: [1.], 2: [1., 1.], 3: [1., 2., 1.], 4: [1., 3., 3., 1.],
            5: [1., 4., 6., 4., 1.], 6: [1., 5., 10., 10., 5., 1.],
            7: [1., 6., 15., 20., 15., 6., 1.]}
    if filt_size not in taps:
        raise ValueError(f"unsupported filt_size {filt_size}")
    a = np.asarray(taps[filt_size], np.float64)
    return a / a.sum()


def get_filter(filt_size=3):
    """2-D blur filter, identical to the PyTorch reference's get_filter."""
    a = _binomial_1d(filt_size)
    return jnp.asarray(np.outer(a, a), dtype=jnp.float32)


def _pad_index(k, size, lo, mode):
    """Map padded index k -> source index in [0, size); None => zero contribution."""
    r = k - lo
    if 0 <= r < size:
        return r
    if mode == 'zero':
        return None
    if mode == 'reflect':
        r = -r if r < 0 else 2 * (size - 1) - r
    else:                       # 'edge' / replicate
        r = 0 if r < 0 else size - 1
    return int(min(max(r, 0), size - 1))


def _round_up(x, m):
    return ((x + m - 1) // m) * m


@functools.lru_cache(maxsize=None)
def _build_operators(h_in, w_in, filt_size, stride, pads, mode, rows_per_chunk):
    """Pad-folded banded operators: out = V @ x @ B, chunked vertically.

    Returns (a_all, bmat, r0s, win, ho, wo, grid_h) as numpy arrays / ints:
      a_all : (grid_h, rows_per_chunk, win)  per-chunk vertical taps (pad folded)
      bmat  : (w_in, wo)                     horizontal taps (pad folded)
      r0s   : (grid_h,) int32                row-window start per chunk
    """
    l, r, t, b = pads
    f, s = filt_size, stride
    taps = _binomial_1d(f)
    ho = (h_in + t + b - f) // s + 1
    wo = (w_in + l + r - f) // s + 1

    vmat = np.zeros((ho, h_in), np.float64)
    for q in range(ho):
        for i in range(f):
            m = _pad_index(s * q + i, h_in, t, mode)
            if m is not None:
                vmat[q, m] += taps[i]

    bmat = np.zeros((w_in, wo), np.float64)
    for q in range(wo):
        for j in range(f):
            m = _pad_index(s * q + j, w_in, l, mode)
            if m is not None:
                bmat[m, q] += taps[j]

    grid_h = -(-ho // rows_per_chunk)
    mins, spans = [], []
    for hb in range(grid_h):
        rows = vmat[hb * rows_per_chunk: min((hb + 1) * rows_per_chunk, ho)]
        cols = np.nonzero(np.any(rows != 0.0, axis=0))[0]
        if cols.size == 0:
            mins.append(0); spans.append(1)
        else:
            mins.append(int(cols.min())); spans.append(int(cols.max()) - int(cols.min()) + 1)
    win = min(h_in, _round_up(max(spans), 8))
    r0s = np.array([max(0, min(mins[hb], h_in - win)) for hb in range(grid_h)], np.int32)

    a_all = np.zeros((grid_h, rows_per_chunk, win), np.float32)
    for hb in range(grid_h):
        hi = min((hb + 1) * rows_per_chunk, ho)
        a_all[hb, : hi - hb * rows_per_chunk, :] = \
            vmat[hb * rows_per_chunk: hi, r0s[hb]: r0s[hb] + win]
        chk = vmat[hb * rows_per_chunk: hi].copy()
        chk[:, r0s[hb]: r0s[hb] + win] = 0.0
        assert not np.any(chk), "row window does not cover all taps"

    return a_all, bmat.astype(np.float32), r0s, win, ho, wo, grid_h


def _blurpool_kernel(r0_ref, a_ref, b_ref, x_ref, o_ref, *, planes, win):
    """Blur + stride-downsample one output-row chunk of `planes` (n,c) planes.

    r0_ref : SMEM (grid_h,)          row-window start per h chunk (scalar prefetch)
    a_ref  : VMEM (R, win)           vertical taps + row decimation (pad folded)
    b_ref  : VMEM (W, Wo)            horizontal taps + col decimation (pad folded)
    x_ref  : VMEM (P, H, W)          unpadded input planes (resident across h)
    o_ref  : VMEM (P, R, Wo)         output row chunk for each plane
    """
    h = pl.program_id(1)
    r0 = r0_ref[h]
    a = a_ref[...]
    b = b_ref[...]
    for p in range(planes):                      # small static unroll (P <= 8)
        xc = x_ref.at[p][pl.ds(r0, win), :].astype(a.dtype)          # (win, W)
        v = jnp.dot(a, xc, preferred_element_type=jnp.float32)       # (R, W)
        out = jnp.dot(v.astype(b.dtype), b,
                      preferred_element_type=jnp.float32)            # (R, Wo)
        o_ref[p] = out.astype(o_ref.dtype)


class Downsample:
    """JAX/Pallas equivalent of the PyTorch Downsample module (forward only)."""

    def __init__(self, channels, pad_type='reflect', filt_size=3, stride=2, pad_off=0):
        self.filt_size = filt_size
        self.pad_off = pad_off
        self.pad_sizes = [int(1.0 * (filt_size - 1) / 2),
                          int(np.ceil(1.0 * (filt_size - 1) / 2)),
                          int(1.0 * (filt_size - 1) / 2),
                          int(np.ceil(1.0 * (filt_size - 1) / 2))]
        self.pad_sizes = [p + pad_off for p in self.pad_sizes]
        self.stride = stride
        self.off = int((stride - 1) / 2.0)
        self.channels = channels
        self.pad_type = pad_type
        self.taps = _binomial_1d(filt_size)
        self.filt = get_filter(filt_size)        # parity with the torch buffer

    def _pad(self, x):
        # PyTorch pad_sizes order is (left, right, top, bottom). Used only by the
        # filt_size==1 path and the pure-JAX reference; the kernel path folds
        # padding into its tap matrices.
        l, r, t, b = self.pad_sizes
        if max(self.pad_sizes) == 0:
            return x
        mode = _PAD_MODE[self.pad_type]
        mode = 'constant' if mode == 'zero' else mode
        return jnp.pad(x, ((0, 0), (0, 0), (t, b), (l, r)), mode=mode)

    def __call__(self, inp):
        n, c, h_in, w_in = (int(d) for d in inp.shape)
        f, s = self.filt_size, self.stride
        if f == 1:
            # No blur taps -> pure strided subsampling.
            if self.pad_off == 0:
                return inp[:, :, ::s, ::s]
            return self._pad(inp)[:, :, ::s, ::s]

        mode = _PAD_MODE[self.pad_type]
        l, r, t, b = self.pad_sizes
        ho = (h_in + t + b - f) // s + 1
        wo = (w_in + l + r - f) // s + 1

        # Small output-row chunks: vertical MXU work scales with the chunk size
        # and the plane is resident, so there is no DMA reason to go bigger.
        rows = ho if ho <= 32 else 32

        a_np, b_np, r0s_np, win, ho2, wo2, grid_h = _build_operators(
            h_in, w_in, f, s, (l, r, t, b), mode, rows)
        assert (ho2, wo2) == (ho, wo)

        compute_dtype = jnp.bfloat16 if inp.dtype == jnp.bfloat16 else jnp.float32
        a_all = jnp.asarray(a_np, compute_dtype)
        bmat = jnp.asarray(b_np, compute_dtype)
        r0s = jnp.asarray(r0s_np)

        planes = n * c
        x = inp.reshape(planes, h_in, w_in)       # NCHW kept; free reshape
        isz = x.dtype.itemsize
        plane_bytes = h_in * w_in * isz
        # Batch several (n,c) planes per grid step when planes are small, to
        # amortize the ~0.35us fixed per-step overhead.
        pblk = max(1, min(planes, 8, (512 * 1024) // max(1, plane_bytes)))
        grid_p = pl.cdiv(planes, pblk)

        csz = 2 if compute_dtype == jnp.bfloat16 else 4
        vmem_est = (2 * pblk * plane_bytes               # resident plane block (x2 buf)
                    + 2 * rows * win * csz               # A chunk
                    + 2 * w_in * wo * csz                # B
                    + 2 * pblk * rows * wo * isz         # output block
                    + 2 * (win + rows) * w_in * 4        # xc / v temporaries
                    + 2 * rows * wo * 4)
        vmem_limit = int(min(100 * 2**20, max(32 * 2**20, 2 * vmem_est + (4 << 20))))

        kernel = functools.partial(_blurpool_kernel, planes=pblk, win=win)
        out = pl.pallas_call(
            kernel,
            out_shape=jax.ShapeDtypeStruct((planes, ho, wo), inp.dtype),
            grid_spec=pltpu.PrefetchScalarGridSpec(
                num_scalar_prefetch=1,
                grid=(grid_p, grid_h),
                in_specs=[
                    pl.BlockSpec((None, rows, win), lambda p, h, sref: (h, 0, 0)),
                    pl.BlockSpec((w_in, wo), lambda p, h, sref: (0, 0)),
                    pl.BlockSpec((pblk, h_in, w_in), lambda p, h, sref: (p, 0, 0)),
                ],
                out_specs=pl.BlockSpec((pblk, rows, wo), lambda p, h, sref: (p, h, 0)),
            ),
            compiler_params=pltpu.CompilerParams(
                dimension_semantics=("parallel", "parallel"),
                vmem_limit_bytes=vmem_limit),
        )(r0s, a_all, bmat, x)

        return out.reshape(n, c, ho, wo)


def _reference(x, module):
    """Pure-JAX reference: pad + depthwise conv, identical to F.conv2d(groups=C)."""
    xp = module._pad(x.astype(jnp.float32))
    filt2d = jnp.asarray(np.outer(module.taps, module.taps), jnp.float32)
    filt = jnp.tile(filt2d[None, None], (x.shape[1], 1, 1, 1))        # (C,1,f,f)
    return lax.conv_general_dilated(
        xp, filt,
        window_strides=(module.stride, module.stride),
        padding='VALID',
        feature_group_count=x.shape[1],
        dimension_numbers=('NCHW', 'OIHW', 'NCHW'),
        precision=lax.Precision.HIGHEST)


if __name__ == "__main__":
    key = jax.random.PRNGKey(0)
    k1, k2, k3 = jax.random.split(key, 3)

    # 1) Default config: reflect pad, filt_size=3, stride=2.
    x1 = jax.random.normal(k1, (2, 4, 16, 16), dtype=jnp.float32)     # NCHW
    ds1 = Downsample(channels=4)
    o1 = jax.block_until_ready(ds1(x1))
    r1 = _reference(x1, ds1)
    assert o1.shape == (2, 4, 8, 8), o1.shape
    assert np.allclose(np.asarray(o1), np.asarray(r1), atol=2e-2, rtol=2e-2)

    # 2) Larger odd filter, odd spatial size (whole-plane window path).
    x2 = jax.random.normal(k2, (2, 3, 30, 30), dtype=jnp.float32)
    ds2 = Downsample(channels=3, filt_size=5, stride=2)
    o2 = jax.block_until_ready(ds2(x2))
    r2 = _reference(x2, ds2)
    assert o2.shape == r2.shape, (o2.shape, r2.shape)
    assert np.allclose(np.asarray(o2), np.asarray(r2), atol=2e-2, rtol=2e-2)

    # 3) Even filter, replicate pad, multiple ragged row chunks + clamped windows.
    x3 = jax.random.normal(k3, (1, 3, 96, 80), dtype=jnp.float32)
    ds3 = Downsample(channels=3, filt_size=4, stride=2, pad_type='repl')
    o3 = jax.block_until_ready(ds3(x3))
    r3 = _reference(x3, ds3)
    assert o3.shape == r3.shape, (o3.shape, r3.shape)
    assert np.allclose(np.asarray(o3), np.asarray(r3), atol=2e-2, rtol=2e-2)

    # 4) bf16 path (native bf16 MXU feeds, bf16 plane residency).
    x4 = x1.astype(jnp.bfloat16)
    o4 = jax.block_until_ready(ds1(x4))
    r4 = _reference(x4, ds1)
    assert o4.dtype == jnp.bfloat16
    assert np.allclose(np.asarray(o4.astype(jnp.float32)), np.asarray(r4),
                       atol=6e-2, rtol=6e-2)

    print("KERNEL_OK")
</pallas_src>

<mosaic_0001>
module attributes {stable_mosaic.version = 11 : i64} {
  func.func @_blurpool_kernel(%arg0: i32, %arg1: i32, %arg2: memref<1xi32, #tpu.memory_space<smem>>, %arg3: memref<1x8x16xf32, #tpu.memory_space<vmem>>, %arg4: memref<16x8xf32, #tpu.memory_space<vmem>>, %arg5: memref<8x16x16xf32, #tpu.memory_space<vmem>>, %arg6: memref<8x8x8xf32, #tpu.memory_space<vmem>>) attributes {dimension_semantics = [#tpu.dimension_semantics<parallel>, #tpu.dimension_semantics<parallel>], iteration_bounds = array<i64: 1, 1>, scalar_prefetch = 1 : i64, scratch_operands = 0 : i64, tpu.core_type = #tpu.core_type<tc>, window_params = [{transform_indices = @transform_0, window_bounds = array<i64: 1, 8, 16>}, {pipeline_mode = #tpu.pipeline_mode<synchronous>, transform_indices = @transform_1, window_bounds = array<i64: 16, 8>}, {transform_indices = @transform_2, window_bounds = array<i64: 8, 16, 16>}, {transform_indices = @transform_3, window_bounds = array<i64: 8, 8, 8>}]} {
    %0 = arith.index_cast %arg1 : i32 to index
    %1 = memref.load %arg2[%0] : memref<1xi32, #tpu.memory_space<smem>>
    %c0 = arith.constant 0 : index
    %c0_0 = arith.constant 0 : index
    %c0_1 = arith.constant 0 : index
    %2 = vector.load %arg3[%c0, %c0_0, %c0_1] : memref<1x8x16xf32, #tpu.memory_space<vmem>>, vector<1x8x16xf32>
    %3 = vector.shape_cast %2 : vector<1x8x16xf32> to vector<8x16xf32>
    %c0_2 = arith.constant 0 : index
    %c0_3 = arith.constant 0 : index
    %4 = vector.load %arg4[%c0_2, %c0_3] : memref<16x8xf32, #tpu.memory_space<vmem>>, vector<16x8xf32>
    %c0_i32 = arith.constant 0 : i32
    %c0_i32_4 = arith.constant 0 : i32
    %c0_i32_5 = arith.constant 0 : i32
    %5 = tpu.memref_slice %arg5[%c0_i32, %c0_i32_4, %c0_i32_5] : memref<8x16x16xf32, #tpu.memory_space<vmem>> -> memref<1x16x16xf32, #tpu.memory_space<vmem>>
    %6 = tpu.memref_squeeze %5 : memref<1x16x16xf32, #tpu.memory_space<vmem>> -> memref<16x16xf32, #tpu.memory_space<vmem>>
    %7 = arith.index_cast %1 : i32 to index
    %c0_6 = arith.constant 0 : index
    %8 = vector.load %6[%7, %c0_6] : memref<16x16xf32, #tpu.memory_space<vmem>>, vector<16x16xf32>
    %cst = arith.constant dense<0.000000e+00> : vector<8x16xf32>
    %9 = tpu.matmul %3, %8, %cst {dimension_numbers = #tpu.dot_dimension_numbers<[1], [0], [0], [1], [0, 0, 1, 1], [], []>} : vector<8x16xf32>, vector<16x16xf32>, vector<8x16xf32> -> vector<8x16xf32>
    %cst_7 = arith.constant dense<0.000000e+00> : vector<8x8xf32>
    %10 = tpu.matmul %9, %4, %cst_7 {dimension_numbers = #tpu.dot_dimension_numbers<[1], [0], [0], [1], [0, 0, 1, 1], [], []>} : vector<8x16xf32>, vector<16x8xf32>, vector<8x8xf32> -> vector<8x8xf32>
    %c0_8 = arith.constant 0 : index
    %c0_9 = arith.constant 0 : index
    %c0_10 = arith.constant 0 : index
    %11 = vector.load %arg6[%c0_8, %c0_9, %c0_10] : memref<8x8x8xf32, #tpu.memory_space<vmem>>, vector<1x8x8xf32>
    %12 = vector.shape_cast %11 : vector<1x8x8xf32> to vector<8x8xf32>
    %13 = vector.shape_cast %10 : vector<8x8xf32> to vector<1x8x8xf32>
    tpu.vector_store %arg6[%c0_8, %c0_9, %c0_10], %13 {strides = array<i32>} : memref<8x8x8xf32, #tpu.memory_space<vmem>>, vector<1x8x8xf32>,
    %c1_i32 = arith.constant 1 : i32
    %c0_i32_11 = arith.constant 0 : i32
    %c0_i32_12 = arith.constant 0 : i32
    %14 = tpu.memref_slice %arg5[%c1_i32, %c0_i32_11, %c0_i32_12] : memref<8x16x16xf32, #tpu.memory_space<vmem>> -> memref<1x16x16xf32, #tpu.memory_space<vmem>>
    %15 = tpu.memref_squeeze %14 : memref<1x16x16xf32, #tpu.memory_space<vmem>> -> memref<16x16xf32, #tpu.memory_space<vmem>>
    %16 = arith.index_cast %1 : i32 to index
    %c0_13 = arith.constant 0 : index
    %17 = vector.load %15[%16, %c0_13] : memref<16x16xf32, #tpu.memory_space<vmem>>, vector<16x16xf32>
    %cst_14 = arith.constant dense<0.000000e+00> : vector<8x16xf32>
    %18 = tpu.matmul %3, %17, %cst_14 {dimension_numbers = #tpu.dot_dimension_numbers<[1], [0], [0], [1], [0, 0, 1, 1], [], []>} : vector<8x16xf32>, vector<16x16xf32>, vector<8x16xf32> -> vector<8x16xf32>
    %cst_15 = arith.constant dense<0.000000e+00> : vector<8x8xf32>
    %19 = tpu.matmul %18, %4, %cst_15 {dimension_numbers = #tpu.dot_dimension_numbers<[1], [0], [0], [1], [0, 0, 1, 1], [], []>} : vector<8x16xf32>, vector<16x8xf32>, vector<8x8xf32> -> vector<8x8xf32>
    %c1 = arith.constant 1 : index
    %c0_16 = arith.constant 0 : index
    %c0_17 = arith.constant 0 : index
    %20 = vector.load %arg6[%c1, %c0_16, %c0_17] : memref<8x8x8xf32, #tpu.memory_space<vmem>>, vector<1x8x8xf32>
    %21 = vector.shape_cast %20 : vector<1x8x8xf32> to vector<8x8xf32>
    %22 = vector.shape_cast %19 : vector<8x8xf32> to vector<1x8x8xf32>
    tpu.vector_store %arg6[%c1, %c0_16, %c0_17], %22 {strides = array<i32>} : memref<8x8x8xf32, #tpu.memory_space<vmem>>, vector<1x8x8xf32>,
    %c2_i32 = arith.constant 2 : i32
    %c0_i32_18 = arith.constant 0 : i32
    %c0_i32_19 = arith.constant 0 : i32
    %23 = tpu.memref_slice %arg5[%c2_i32, %c0_i32_18, %c0_i32_19] : memref<8x16x16xf32, #tpu.memory_space<vmem>> -> memref<1x16x16xf32, #tpu.memory_space<vmem>>
    %24 = tpu.memref_squeeze %23 : memref<1x16x16xf32, #tpu.memory_space<vmem>> -> memref<16x16xf32, #tpu.memory_space<vmem>>
    %25 = arith.index_cast %1 : i32 to index
    %c0_20 = arith.constant 0 : index
    %26 = vector.load %24[%25, %c0_20] : memref<16x16xf32, #tpu.memory_space<vmem>>, vector<16x16xf32>
    %cst_21 = arith.constant dense<0.000000e+00> : vector<8x16xf32>
    %27 = tpu.matmul %3, %26, %cst_21 {dimension_numbers = #tpu.dot_dimension_numbers<[1], [0], [0], [1], [0, 0, 1, 1], [], []>} : vector<8x16xf32>, vector<16x16xf32>, vector<8x16xf32> -> vector<8x16xf32>
    %cst_22 = arith.constant dense<0.000000e+00> : vector<8x8xf32>
    %28 = tpu.matmul %27, %4, %cst_22 {dimension_numbers = #tpu.dot_dimension_numbers<[1], [0], [0], [1], [0, 0, 1, 1], [], []>} : vector<8x16xf32>, vector<16x8xf32>, vector<8x8xf32> -> vector<8x8xf32>
    %c2 = arith.constant 2 : index
    %c0_23 = arith.constant 0 : index
    %c0_24 = arith.constant 0 : index
    %29 = vector.load %arg6[%c2, %c0_23, %c0_24] : memref<8x8x8xf32, #tpu.memory_space<vmem>>, vector<1x8x8xf32>
    %30 = vector.shape_cast %29 : vector<1x8x8xf32> to vector<8x8xf32>
    %31 = vector.shape_cast %28 : vector<8x8xf32> to vector<1x8x8xf32>
    tpu.vector_store %arg6[%c2, %c0_23, %c0_24], %31 {strides = array<i32>} : memref<8x8x8xf32, #tpu.memory_space<vmem>>, vector<1x8x8xf32>,
    %c3_i32 = arith.constant 3 : i32
    %c0_i32_25 = arith.constant 0 : i32
    %c0_i32_26 = arith.constant 0 : i32
    %32 = tpu.memref_slice %arg5[%c3_i32, %c0_i32_25, %c0_i32_26] : memref<8x16x16xf32, #tpu.memory_space<vmem>> -> memref<1x16x16xf32, #tpu.memory_space<vmem>>
    %33 = tpu.memref_squeeze %32 : memref<1x16x16xf32, #tpu.memory_space<vmem>> -> memref<16x16xf32, #tpu.memory_space<vmem>>
    %34 = arith.index_cast %1 : i32 to index
    %c0_27 = arith.constant 0 : index
    %35 = vector.load %33[%34, %c0_27] : memref<16x16xf32, #tpu.memory_space<vmem>>, vector<16x16xf32>
    %cst_28 = arith.constant dense<0.000000e+00> : vector<8x16xf32>
    %36 = tpu.matmul %3, %35, %cst_28 {dimension_numbers = #tpu.dot_dimension_numbers<[1], [0], [0], [1], [0, 0, 1, 1], [], []>} : vector<8x16xf32>, vector<16x16xf32>, vector<8x16xf32> -> vector<8x16xf32>
    %cst_29 = arith.constant dense<0.000000e+00> : vector<8x8xf32>
    %37 = tpu.matmul %36, %4, %cst_29 {dimension_numbers = #tpu.dot_dimension_numbers<[1], [0], [0], [1], [0, 0, 1, 1], [], []>} : vector<8x16xf32>, vector<16x8xf32>, vector<8x8xf32> -> vector<8x8xf32>
    %c3 = arith.constant 3 : index
    %c0_30 = arith.constant 0 : index
    %c0_31 = arith.constant 0 : index
    %38 = vector.load %arg6[%c3, %c0_30, %c0_31] : memref<8x8x8xf32, #tpu.memory_space<vmem>>, vector<1x8x8xf32>
    %39 = vector.shape_cast %38 : vector<1x8x8xf32> to vector<8x8xf32>
    %40 = vector.shape_cast %37 : vector<8x8xf32> to vector<1x8x8xf32>
    tpu.vector_store %arg6[%c3, %c0_30, %c0_31], %40 {strides = array<i32>} : memref<8x8x8xf32, #tpu.memory_space<vmem>>, vector<1x8x8xf32>,
    %c4_i32 = arith.constant 4 : i32
    %c0_i32_32 = arith.constant 0 : i32
    %c0_i32_33 = arith.constant 0 : i32
    %41 = tpu.memref_slice %arg5[%c4_i32, %c0_i32_32, %c0_i32_33] : memref<8x16x16xf32, #tpu.memory_space<vmem>> -> memref<1x16x16xf32, #tpu.memory_space<vmem>>
    %42 = tpu.memref_squeeze %41 : memref<1x16x16xf32, #tpu.memory_space<vmem>> -> memref<16x16xf32, #tpu.memory_space<vmem>>
    %43 = arith.index_cast %1 : i32 to index
    %c0_34 = arith.constant 0 : index
    %44 = vector.load %42[%43, %c0_34] : memref<16x16xf32, #tpu.memory_space<vmem>>, vector<16x16xf32>
    %cst_35 = arith.constant dense<0.000000e+00> : vector<8x16xf32>
    %45 = tpu.matmul %3, %44, %cst_35 {dimension_numbers = #tpu.dot_dimension_numbers<[1], [0], [0], [1], [0, 0, 1, 1], [], []>} : vector<8x16xf32>, vector<16x16xf32>, vector<8x16xf32> -> vector<8x16xf32>
    %cst_36 = arith.constant dense<0.000000e+00> : vector<8x8xf32>
    %46 = tpu.matmul %45, %4, %cst_36 {dimension_numbers = #tpu.dot_dimension_numbers<[1], [0], [0], [1], [0, 0, 1, 1], [], []>} : vector<8x16xf32>, vector<16x8xf32>, vector<8x8xf32> -> vector<8x8xf32>
    %c4 = arith.constant 4 : index
    %c0_37 = arith.constant 0 : index
    %c0_38 = arith.constant 0 : index
    %47 = vector.load %arg6[%c4, %c0_37, %c0_38] : memref<8x8x8xf32, #tpu.memory_space<vmem>>, vector<1x8x8xf32>
    %48 = vector.shape_cast %47 : vector<1x8x8xf32> to vector<8x8xf32>
    %49 = vector.shape_cast %46 : vector<8x8xf32> to vector<1x8x8xf32>
    tpu.vector_store %arg6[%c4, %c0_37, %c0_38], %49 {strides = array<i32>} : memref<8x8x8xf32, #tpu.memory_space<vmem>>, vector<1x8x8xf32>,
    %c5_i32 = arith.constant 5 : i32
    %c0_i32_39 = arith.constant 0 : i32
    %c0_i32_40 = arith.constant 0 : i32
    %50 = tpu.memref_slice %arg5[%c5_i32, %c0_i32_39, %c0_i32_40] : memref<8x16x16xf32, #tpu.memory_space<vmem>> -> memref<1x16x16xf32, #tpu.memory_space<vmem>>
    %51 = tpu.memref_squeeze %50 : memref<1x16x16xf32, #tpu.memory_space<vmem>> -> memref<16x16xf32, #tpu.memory_space<vmem>>
    %52 = arith.index_cast %1 : i32 to index
    %c0_41 = arith.constant 0 : index
    %53 = vector.load %51[%52, %c0_41] : memref<16x16xf32, #tpu.memory_space<vmem>>, vector<16x16xf32>
    %cst_42 = arith.constant dense<0.000000e+00> : vector<8x16xf32>
    %54 = tpu.matmul %3, %53, %cst_42 {dimension_numbers = #tpu.dot_dimension_numbers<[1], [0], [0], [1], [0, 0, 1, 1], [], []>} : vector<8x16xf32>, vector<16x16xf32>, vector<8x16xf32> -> vector<8x16xf32>
    %cst_43 = arith.constant dense<0.000000e+00> : vector<8x8xf32>
    %55 = tpu.matmul %54, %4, %cst_43 {dimension_numbers = #tpu.dot_dimension_numbers<[1], [0], [0], [1], [0, 0, 1, 1], [], []>} : vector<8x16xf32>, vector<16x8xf32>, vector<8x8xf32> -> vector<8x8xf32>
    %c5 = arith.constant 5 : index
    %c0_44 = arith.constant 0 : index
    %c0_45 = arith.constant 0 : index
    %56 = vector.load %arg6[%c5, %c0_44, %c0_45] : memref<8x8x8xf32, #tpu.memory_space<vmem>>, vector<1x8x8xf32>
    %57 = vector.shape_cast %56 : vector<1x8x8xf32> to vector<8x8xf32>
    %58 = vector.shape_cast %55 : vector<8x8xf32> to vector<1x8x8xf32>
    tpu.vector_store %arg6[%c5, %c0_44, %c0_45], %58 {strides = array<i32>} : memref<8x8x8xf32, #tpu.memory_space<vmem>>, vector<1x8x8xf32>,
    %c6_i32 = arith.constant 6 : i32
    %c0_i32_46 = arith.constant 0 : i32
    %c0_i32_47 = arith.constant 0 : i32
    %59 = tpu.memref_slice %arg5[%c6_i32, %c0_i32_46, %c0_i32_47] : memref<8x16x16xf32, #tpu.memory_space<vmem>> -> memref<1x16x16xf32, #tpu.memory_space<vmem>>
    %60 = tpu.memref_squeeze %59 : memref<1x16x16xf32, #tpu.memory_space<vmem>> -> memref<16x16xf32, #tpu.memory_space<vmem>>
    %61 = arith.index_cast %1 : i32 to index
    %c0_48 = arith.constant 0 : index
    %62 = vector.load %60[%61, %c0_48] : memref<16x16xf32, #tpu.memory_space<vmem>>, vector<16x16xf32>
    %cst_49 = arith.constant dense<0.000000e+00> : vector<8x16xf32>
    %63 = tpu.matmul %3, %62, %cst_49 {dimension_numbers = #tpu.dot_dimension_numbers<[1], [0], [0], [1], [0, 0, 1, 1], [], []>} : vector<8x16xf32>, vector<16x16xf32>, vector<8x16xf32> -> vector<8x16xf32>
    %cst_50 = arith.constant dense<0.000000e+00> : vector<8x8xf32>
    %64 = tpu.matmul %63, %4, %cst_50 {dimension_numbers = #tpu.dot_dimension_numbers<[1], [0], [0], [1], [0, 0, 1, 1], [], []>} : vector<8x16xf32>, vector<16x8xf32>, vector<8x8xf32> -> vector<8x8xf32>
    %c6 = arith.constant 6 : index
    %c0_51 = arith.constant 0 : index
    %c0_52 = arith.constant 0 : index
    %65 = vector.load %arg6[%c6, %c0_51, %c0_52] : memref<8x8x8xf32, #tpu.memory_space<vmem>>, vector<1x8x8xf32>
    %66 = vector.shape_cast %65 : vector<1x8x8xf32> to vector<8x8xf32>
    %67 = vector.shape_cast %64 : vector<8x8xf32> to vector<1x8x8xf32>
    tpu.vector_store %arg6[%c6, %c0_51, %c0_52], %67 {strides = array<i32>} : memref<8x8x8xf32, #tpu.memory_space<vmem>>, vector<1x8x8xf32>,
    %c7_i32 = arith.constant 7 : i32
    %c0_i32_53 = arith.constant 0 : i32
    %c0_i32_54 = arith.constant 0 : i32
    %68 = tpu.memref_slice %arg5[%c7_i32, %c0_i32_53, %c0_i32_54] : memref<8x16x16xf32, #tpu.memory_space<vmem>> -> memref<1x16x16xf32, #tpu.memory_space<vmem>>
    %69 = tpu.memref_squeeze %68 : memref<1x16x16xf32, #tpu.memory_space<vmem>> -> memref<16x16xf32, #tpu.memory_space<vmem>>
    %70 = arith.index_cast %1 : i32 to index
    %c0_55 = arith.constant 0 : index
    %71 = vector.load %69[%70, %c0_55] : memref<16x16xf32, #tpu.memory_space<vmem>>, vector<16x16xf32>
    %cst_56 = arith.constant dense<0.000000e+00> : vector<8x16xf32>
    %72 = tpu.matmul %3, %71, %cst_56 {dimension_numbers = #tpu.dot_dimension_numbers<[1], [0], [0], [1], [0, 0, 1, 1], [], []>} : vector<8x16xf32>, vector<16x16xf32>, vector<8x16xf32> -> vector<8x16xf32>
    %cst_57 = arith.constant dense<0.000000e+00> : vector<8x8xf32>
    %73 = tpu.matmul %72, %4, %cst_57 {dimension_numbers = #tpu.dot_dimension_numbers<[1], [0], [0], [1], [0, 0, 1, 1], [], []>} : vector<8x16xf32>, vector<16x8xf32>, vector<8x8xf32> -> vector<8x8xf32>
    %c7 = arith.constant 7 : index
    %c0_58 = arith.constant 0 : index
    %c0_59 = arith.constant 0 : index
    %74 = vector.load %arg6[%c7, %c0_58, %c0_59] : memref<8x8x8xf32, #tpu.memory_space<vmem>>, vector<1x8x8xf32>
    %75 = vector.shape_cast %74 : vector<1x8x8xf32> to vector<8x8xf32>
    %76 = vector.shape_cast %73 : vector<8x8xf32> to vector<1x8x8xf32>
    tpu.vector_store %arg6[%c7, %c0_58, %c0_59], %76 {strides = array<i32>} : memref<8x8x8xf32, #tpu.memory_space<vmem>>, vector<1x8x8xf32>,
    return
  }
  func.func @transform_0(%arg0: i32, %arg1: i32, %arg2: memref<1xi32, #tpu.memory_space<smem>>) -> (i32, i32, i32) {
    %c0_i32 = arith.constant 0 : i32
    %c0_i32_0 = arith.constant 0 : i32
    %c0_i32_1 = arith.constant 0 : i32
    return %arg1, %c0_i32, %c0_i32_0 : i32, i32, i32
  }
  func.func @transform_1(%arg0: i32, %arg1: i32, %arg2: memref<1xi32, #tpu.memory_space<smem>>) -> (i32, i32) {
    %c0_i32 = arith.constant 0 : i32
    %c0_i32_0 = arith.constant 0 : i32
    %c0_i32_1 = arith.constant 0 : i32
    return %c0_i32, %c0_i32_0 : i32, i32
  }
  func.func @transform_2(%arg0: i32, %arg1: i32, %arg2: memref<1xi32, #tpu.memory_space<smem>>) -> (i32, i32, i32) {
    %c0_i32 = arith.constant 0 : i32
    %c0_i32_0 = arith.constant 0 : i32
    %c0_i32_1 = arith.constant 0 : i32
    return %arg0, %c0_i32, %c0_i32_0 : i32, i32, i32
  }
  func.func @transform_3(%arg0: i32, %arg1: i32, %arg2: memref<1xi32, #tpu.memory_space<smem>>) -> (i32, i32, i32) {
    %c0_i32 = arith.constant 0 : i32
    %c0_i32_0 = arith.constant 0 : i32
    return %arg0, %arg1, %c0_i32 : i32, i32, i32
  }
}

</mosaic_0001>

<llo_original>
// kernel: tpu_custom_call.1
$region0: #{tpu_custom_call.1}
  #allocation0 [shape = 'u32[]', space=smem, size = 0x4, offset = 0x4, fixed_abs, tag = 'smem constant byte address 0x4 - core index']
  #allocation1 [shape = 'u32[72,128]{1,0:T(1,128)}', space=vmem, size = 0x9000, scoped, tag = 'internal scratch']
  #allocation2 [shape = 's32[1]{0}', space=sflag, size = 0x4, scoped, tag = 'scoped memory for tpu_custom_call.1']
  #allocation3 [shape = 's32[1]{0:T(128)S(6)}', space=smem, size = 0x200, scoped, tag = 'prefetched SMEM operand 0']
  %s0 = inlined_call_operand.<no memory space> [shape: s32[1], index: 0, kind: input, shape index: {}]
  %s1 = inlined_call_operand.vmem [shape: f32[1,8,16], index: 1, kind: input, shape index: {}]
  %s2 = inlined_call_operand.vmem [shape: f32[16,8], index: 2, kind: input, shape index: {}]
  %s3 = inlined_call_operand.hbm [shape: f32[8,16,16], index: 3, kind: input, shape index: {}]
  %s4 = inlined_call_operand.hbm [shape: f32[8,8,8], index: 4, kind: output, shape index: {}]
  %s5 = sld [smem:[#allocation0]]
  $region26: #{tpu_custom_call.1} parent=0
    _
  %s7 = ssub.s32 1, %s5
  %s8 = scalar_select 0, %s7, %s5
  %9 = sst [smem:[#allocation3]] %s0
  $region1: #{tpu_custom_call.1} parent=0
    #allocation4 [shape = 'u8[65536]{0}', space=vmem, size = 0x10000, scoped, tag = 'input window, operand 3, single buffered']
    #allocation5 [shape = 's32[1]{0}', space=sflag, size = 0x4, scoped, tag = 'scoped memory for tpu_custom_call.1']
    #allocation6 [shape = 's32[1]{0}', space=sflag, size = 0x4, scoped, tag = 'scoped memory for tpu_custom_call.1']
    #allocation7 [shape = 'u8[32768]{0}', space=vmem, size = 0x8000, scoped, tag = 'output window, operand 0, single buffered']
    %10 = vsyncpa [#allocation5], 0
    %11 = vsyncpa [#allocation6], 0
    // Predicated region
    $region2: #{tpu_custom_call.1} parent=1 // pred_check
      _
    $region3: #{tpu_custom_call.1} parent=1 // pred_check_branch
      %13 = sbr.rel (0) target = $region5
    $region4: #{tpu_custom_call.1} parent=1 // pred_region
      _
    $region5: #{tpu_custom_call.1} parent=1 // pred_fallthru
      _
    // Predicated region
    $region6: #{tpu_custom_call.1} parent=1 // pred_check
      _
    $region7: #{tpu_custom_call.1} parent=1 // pred_check_branch
      %15 = sbr.rel (0) target = $region9
    $region8: #{tpu_custom_call.1} parent=1 // pred_region
      _
    $region9: #{tpu_custom_call.1} parent=1 // pred_fallthru
      _
    // Predicated region
    $region10: #{tpu_custom_call.1} parent=1 // pred_check
      _
    $region11: #{tpu_custom_call.1} parent=1 // pred_check_branch
      %17 = sbr.rel (0) target = $region13
    $region12: #{tpu_custom_call.1} parent=1 // pred_region
      %19 = vsyncadd [#allocation5], 0
      %s20 = sshll.u32 %s3, 4
      %s21 = int_to_ptr.hbm [resolvable:$true] %s20
      %s22 = sshll.u32 [#allocation4], 4
      %s23 = int_to_ptr.vmem [resolvable:$true] %s22
      %28 = dma.hbm_to_vmem [thread:$0]  %s21, 2048, %s23, [#allocation5], 128, 128, 8
    $region13: #{tpu_custom_call.1} parent=1 // pred_fallthru
      _
    // Predicated region
    $region14: #{tpu_custom_call.1} parent=1 // pred_check
      _
    $region15: #{tpu_custom_call.1} parent=1 // pred_check_branch
      %30 = sbr.rel (0) target = $region17
    $region16: #{tpu_custom_call.1} parent=1 // pred_region
      %32 = dma.done [#allocation5], 2048
    $region17: #{tpu_custom_call.1} parent=1 // pred_fallthru
      _
    %s33 = sld [smem:[#allocation3]]
    %v34 = vld [vmem:[%s1] sm:$0xff]
    %v35 = vld [vmem:[%s2] sm:$0xff]
    %v36 = vld [vmem:[%s2 + $0x8] sm:$0xff]
    %s37 = scalar_lea.vmem [#allocation4], %s33
    %v38 = vld [vmem:[%s37] sm:$0xff]
    %v39 = vld [vmem:[%s37 + $0x8] sm:$0xff]
    %vm40 = vcmask 130048
    %v42 = vsel %vm40, %v34, 0
    %44 = vmatpush.msra.mxu0 0.0
    %45 = vmatpush.msra.mxu0 0.0
    %46 = vmatpush.msra.mxu0 0.0
    %47 = vmatpush.msra.mxu0 0.0
    %48 = vmatpush.msra.mxu0 0.0
    %49 = vmatpush.msra.mxu0 0.0
    %50 = vmatpush.msra.mxu0 0.0
    %51 = vmatpush.msra.mxu0 0.0
    %52 = vmatpush.msra.mxu0 0.0
    %53 = vmatpush.msra.mxu0 0.0
    %54 = vmatpush.msra.mxu0 0.0
    %55 = vmatpush.msra.mxu0 0.0
    %56 = vmatpush.msra.mxu0 0.0
    %57 = vmatpush.msra.mxu0 0.0
    %58 = vmatpush.msra.mxu0 %v39
    %59 = vmatpush.msra.mxu0 %v38
    %60 = vmatmul.f32.gmra.mxu0 %v42
    %v61 = vpop.f32.mrf.mxu0
    %v62 = vadd.f32 0.0, %v61
    %63 = vdwg.mxu0
    %v65 = vsel %vm40, %v62, 0
    %67 = vmatpush.msra.mxu0 0.0
    %68 = vmatpush.msra.mxu0 0.0
    %69 = vmatpush.msra.mxu0 0.0
    %70 = vmatpush.msra.mxu0 0.0
    %71 = vmatpush.msra.mxu0 0.0
    %72 = vmatpush.msra.mxu0 0.0
    %73 = vmatpush.msra.mxu0 0.0
    %74 = vmatpush.msra.mxu0 0.0
    %75 = vmatpush.msra.mxu0 0.0
    %76 = vmatpush.msra.mxu0 0.0
    %77 = vmatpush.msra.mxu0 0.0
    %78 = vmatpush.msra.mxu0 0.0
    %79 = vmatpush.msra.mxu0 0.0
    %80 = vmatpush.msra.mxu0 0.0
    %81 = vmatpush.msra.mxu0 %v36
    %82 = vmatpush.msra.mxu0 %v35
    %83 = vmatmul.f32.gmra.mxu0 %v65
    %v84 = vpop.f32.mrf.mxu0
    %v85 = vadd.f32 0.0, %v84
    %86 = vdwg.mxu0
    %vm87 = vcmask 64512
    %88 = vst.msk [vmem:[#allocation7] sm:$0xff] %vm87, %v85
    %s89 = scalar_lea.vmem [#allocation4], 16
    %s90 = scalar_lea.vmem %s89, %s33 [#allocation4]
    %v91 = vld [vmem:[%s90] sm:$0xff]
    %v92 = vld [vmem:[%s90 + $0x8] sm:$0xff]
    %93 = vmatpush.msra.mxu0 0.0
    %94 = vmatpush.msra.mxu0 0.0
    %95 = vmatpush.msra.mxu0 0.0
    %96 = vmatpush.msra.mxu0 0.0
    %97 = vmatpush.msra.mxu0 0.0
    %98 = vmatpush.msra.mxu0 0.0
    %99 = vmatpush.msra.mxu0 0.0
    %100 = vmatpush.msra.mxu0 0.0
    %101 = vmatpush.msra.mxu0 0.0
    %102 = vmatpush.msra.mxu0 0.0
    %103 = vmatpush.msra.mxu0 0.0
    %104 = vmatpush.msra.mxu0 0.0
    %105 = vmatpush.msra.mxu0 0.0
    %106 = vmatpush.msra.mxu0 0.0
    %107 = vmatpush.msra.mxu0 %v92
    %108 = vmatpush.msra.mxu0 %v91
    %109 = vmatmul.f32.gmra.mxu0 %v42
    %v110 = vpop.f32.mrf.mxu0
    %v111 = vadd.f32 0.0, %v110
    %112 = vdwg.mxu0
    %v114 = vsel %vm40, %v111, 0
    %116 = vmatpush.msra.mxu0 0.0
    %117 = vmatpush.msra.mxu0 0.0
    %118 = vmatpush.msra.mxu0 0.0
    %119 = vmatpush.msra.mxu0 0.0
    %120 = vmatpush.msra.mxu0 0.0
    %121 = vmatpush.msra.mxu0 0.0
    %122 = vmatpush.msra.mxu0 0.0
    %123 = vmatpush.msra.mxu0 0.0
    %124 = vmatpush.msra.mxu0 0.0
    %125 = vmatpush.msra.mxu0 0.0
    %126 = vmatpush.msra.mxu0 0.0
    %127 = vmatpush.msra.mxu0 0.0
    %128 = vmatpush.msra.mxu0 0.0
    %129 = vmatpush.msra.mxu0 0.0
    %130 = vmatpush.msra.mxu0 %v36
    %131 = vmatpush.msra.mxu0 %v35
    %132 = vmatmul.f32.gmra.mxu0 %v114
    %v133 = vpop.f32.mrf.mxu0
    %v134 = vadd.f32 0.0, %v133
    %135 = vdwg.mxu0
    %s136 = scalar_lea.vmem [#allocation7], 8
    %137 = vst.msk [vmem:[%s136] sm:$0xff] %vm87, %v134
    %s138 = scalar_lea.vmem [#allocation4], 32
    %s139 = scalar_lea.vmem %s138, %s33 [#allocation4]
    %v140 = vld [vmem:[%s139] sm:$0xff]
    %v141 = vld [vmem:[%s139 + $0x8] sm:$0xff]
    %142 = vmatpush.msra.mxu0 0.0
    %143 = vmatpush.msra.mxu0 0.0
    %144 = vmatpush.msra.mxu0 0.0
    %145 = vmatpush.msra.mxu0 0.0
    %146 = vmatpush.msra.mxu0 0.0
    %147 = vmatpush.msra.mxu0 0.0
    %148 = vmatpush.msra.mxu0 0.0
    %149 = vmatpush.msra.mxu0 0.0
    %150 = vmatpush.msra.mxu0 0.0
    %151 = vmatpush.msra.mxu0 0.0
    %152 = vmatpush.msra.mxu0 0.0
    %153 = vmatpush.msra.mxu0 0.0
    %154 = vmatpush.msra.mxu0 0.0
    %155 = vmatpush.msra.mxu0 0.0
    %156 = vmatpush.msra.mxu0 %v141
    %157 = vmatpush.msra.mxu0 %v140
    %158 = vmatmul.f32.gmra.mxu0 %v42
    %v159 = vpop.f32.mrf.mxu0
    %v160 = vadd.f32 0.0, %v159
    %161 = vdwg.mxu0
    %v163 = vsel %vm40, %v160, 0
    %165 = vmatpush.msra.mxu0 0.0
    %166 = vmatpush.msra.mxu0 0.0
    %167 = vmatpush.msra.mxu0 0.0
    %168 = vmatpush.msra.mxu0 0.0
    %169 = vmatpush.msra.mxu0 0.0
    %170 = vmatpush.msra.mxu0 0.0
    %171 = vmatpush.msra.mxu0 0.0
    %172 = vmatpush.msra.mxu0 0.0
    %173 = vmatpush.msra.mxu0 0.0
    %174 = vmatpush.msra.mxu0 0.0
    %175 = vmatpush.msra.mxu0 0.0
    %176 = vmatpush.msra.mxu0 0.0
    %177 = vmatpush.msra.mxu0 0.0
    %178 = vmatpush.msra.mxu0 0.0
    %179 = vmatpush.msra.mxu0 %v36
    %180 = vmatpush.msra.mxu0 %v35
    %181 = vmatmul.f32.gmra.mxu0 %v163
    %v182 = vpop.f32.mrf.mxu0
    %v183 = vadd.f32 0.0, %v182
    %184 = vdwg.mxu0
    %s185 = scalar_lea.vmem [#allocation7], 16
    %186 = vst.msk [vmem:[%s185] sm:$0xff] %vm87, %v183
    %s187 = scalar_lea.vmem [#allocation4], 48
    %s188 = scalar_lea.vmem %s187, %s33 [#allocation4]
    %v189 = vld [vmem:[%s188] sm:$0xff]
    %v190 = vld [vmem:[%s188 + $0x8] sm:$0xff]
    %191 = vmatpush.msra.mxu0 0.0
    %192 = vmatpush.msra.mxu0 0.0
    %193 = vmatpush.msra.mxu0 0.0
    %194 = vmatpush.msra.mxu0 0.0
    %195 = vmatpush.msra.mxu0 0.0
    %196 = vmatpush.msra.mxu0 0.0
    %197 = vmatpush.msra.mxu0 0.0
    %198 = vmatpush.msra.mxu0 0.0
    %199 = vmatpush.msra.mxu0 0.0
    %200 = vmatpush.msra.mxu0 0.0
    %201 = vmatpush.msra.mxu0 0.0
    %202 = vmatpush.msra.mxu0 0.0
    %203 = vmatpush.msra.mxu0 0.0
    %204 = vmatpush.msra.mxu0 0.0
    %205 = vmatpush.msra.mxu0 %v190
    %206 = vmatpush.msra.mxu0 %v189
    %207 = vmatmul.f32.gmra.mxu0 %v42
    %v208 = vpop.f32.mrf.mxu0
    %v209 = vadd.f32 0.0, %v208
    %210 = vdwg.mxu0
    %v212 = vsel %vm40, %v209, 0
    %214 = vmatpush.msra.mxu0 0.0
    %215 = vmatpush.msra.mxu0 0.0
    %216 = vmatpush.msra.mxu0 0.0
    %217 = vmatpush.msra.mxu0 0.0
    %218 = vmatpush.msra.mxu0 0.0
    %219 = vmatpush.msra.mxu0 0.0
    %220 = vmatpush.msra.mxu0 0.0
    %221 = vmatpush.msra.mxu0 0.0
    %222 = vmatpush.msra.mxu0 0.0
    %223 = vmatpush.msra.mxu0 0.0
    %224 = vmatpush.msra.mxu0 0.0
    %225 = vmatpush.msra.mxu0 0.0
    %226 = vmatpush.msra.mxu0 0.0
    %227 = vmatpush.msra.mxu0 0.0
    %228 = vmatpush.msra.mxu0 %v36
    %229 = vmatpush.msra.mxu0 %v35
    %230 = vmatmul.f32.gmra.mxu0 %v212
    %v231 = vpop.f32.mrf.mxu0
    %v232 = vadd.f32 0.0, %v231
    %233 = vdwg.mxu0
    %s234 = scalar_lea.vmem [#allocation7], 24
    %235 = vst.msk [vmem:[%s234] sm:$0xff] %vm87, %v232
    %s236 = scalar_lea.vmem [#allocation4], 64
    %s237 = scalar_lea.vmem %s236, %s33 [#allocation4]
    %v238 = vld [vmem:[%s237] sm:$0xff]
    %v239 = vld [vmem:[%s237 + $0x8] sm:$0xff]
    %240 = vmatpush.msra.mxu0 0.0
    %241 = vmatpush.msra.mxu0 0.0
    %242 = vmatpush.msra.mxu0 0.0
    %243 = vmatpush.msra.mxu0 0.0
    %244 = vmatpush.msra.mxu0 0.0
    %245 = vmatpush.msra.mxu0 0.0
    %246 = vmatpush.msra.mxu0 0.0
    %247 = vmatpush.msra.mxu0 0.0
    %248 = vmatpush.msra.mxu0 0.0
    %249 = vmatpush.msra.mxu0 0.0
    %250 = vmatpush.msra.mxu0 0.0
    %251 = vmatpush.msra.mxu0 0.0
    %252 = vmatpush.msra.mxu0 0.0
    %253 = vmatpush.msra.mxu0 0.0
    %254 = vmatpush.msra.mxu0 %v239
    %255 = vmatpush.msra.mxu0 %v238
    %256 = vmatmul.f32.gmra.mxu0 %v42
    %v257 = vpop.f32.mrf.mxu0
    %v258 = vadd.f32 0.0, %v257
    %259 = vdwg.mxu0
    %v261 = vsel %vm40, %v258, 0
    %263 = vmatpush.msra.mxu0 0.0
    %264 = vmatpush.msra.mxu0 0.0
    %265 = vmatpush.msra.mxu0 0.0
    %266 = vmatpush.msra.mxu0 0.0
    %267 = vmatpush.msra.mxu0 0.0
    %268 = vmatpush.msra.mxu0 0.0
    %269 = vmatpush.msra.mxu0 0.0
    %270 = vmatpush.msra.mxu0 0.0
    %271 = vmatpush.msra.mxu0 0.0
    %272 = vmatpush.msra.mxu0 0.0
    %273 = vmatpush.msra.mxu0 0.0
    %274 = vmatpush.msra.mxu0 0.0
    %275 = vmatpush.msra.mxu0 0.0
    %276 = vmatpush.msra.mxu0 0.0
    %277 = vmatpush.msra.mxu0 %v36
    %278 = vmatpush.msra.mxu0 %v35
    %279 = vmatmul.f32.gmra.mxu0 %v261
    %v280 = vpop.f32.mrf.mxu0
    %v281 = vadd.f32 0.0, %v280
    %282 = vdwg.mxu0
    %s283 = scalar_lea.vmem [#allocation7], 32
    %284 = vst.msk [vmem:[%s283] sm:$0xff] %vm87, %v281
    %s285 = scalar_lea.vmem [#allocation4], 80
    %s286 = scalar_lea.vmem %s285, %s33 [#allocation4]
    %v287 = vld [vmem:[%s286] sm:$0xff]
    %v288 = vld [vmem:[%s286 + $0x8] sm:$0xff]
    %289 = vmatpush.msra.mxu0 0.0
    %290 = vmatpush.msra.mxu0 0.0
    %291 = vmatpush.msra.mxu0 0.0
    %292 = vmatpush.msra.mxu0 0.0
    %293 = vmatpush.msra.mxu0 0.0
    %294 = vmatpush.msra.mxu0 0.0
    %295 = vmatpush.msra.mxu0 0.0
    %296 = vmatpush.msra.mxu0 0.0
    %297 = vmatpush.msra.mxu0 0.0
    %298 = vmatpush.msra.mxu0 0.0
    %299 = vmatpush.msra.mxu0 0.0
    %300 = vmatpush.msra.mxu0 0.0
    %301 = vmatpush.msra.mxu0 0.0
    %302 = vmatpush.msra.mxu0 0.0
    %303 = vmatpush.msra.mxu0 %v288
    %304 = vmatpush.msra.mxu0 %v287
    %305 = vmatmul.f32.gmra.mxu0 %v42
    %v306 = vpop.f32.mrf.mxu0
    %v307 = vadd.f32 0.0, %v306
    %308 = vdwg.mxu0
    %v310 = vsel %vm40, %v307, 0
    %312 = vmatpush.msra.mxu0 0.0
    %313 = vmatpush.msra.mxu0 0.0
    %314 = vmatpush.msra.mxu0 0.0
    %315 = vmatpush.msra.mxu0 0.0
    %316 = vmatpush.msra.mxu0 0.0
    %317 = vmatpush.msra.mxu0 0.0
    %318 = vmatpush.msra.mxu0 0.0
    %319 = vmatpush.msra.mxu0 0.0
    %320 = vmatpush.msra.mxu0 0.0
    %321 = vmatpush.msra.mxu0 0.0
    %322 = vmatpush.msra.mxu0 0.0
    %323 = vmatpush.msra.mxu0 0.0
    %324 = vmatpush.msra.mxu0 0.0
    %325 = vmatpush.msra.mxu0 0.0
    %326 = vmatpush.msra.mxu0 %v36
    %327 = vmatpush.msra.mxu0 %v35
    %328 = vmatmul.f32.gmra.mxu0 %v310
    %v329 = vpop.f32.mrf.mxu0
    %v330 = vadd.f32 0.0, %v329
    %331 = vdwg.mxu0
    %s332 = scalar_lea.vmem [#allocation7], 40
    %333 = vst.msk [vmem:[%s332] sm:$0xff] %vm87, %v330
    %s334 = scalar_lea.vmem [#allocation4], 96
    %s335 = scalar_lea.vmem %s334, %s33 [#allocation4]
    %v336 = vld [vmem:[%s335] sm:$0xff]
    %v337 = vld [vmem:[%s335 + $0x8] sm:$0xff]
    %338 = vmatpush.msra.mxu0 0.0
    %339 = vmatpush.msra.mxu0 0.0
    %340 = vmatpush.msra.mxu0 0.0
    %341 = vmatpush.msra.mxu0 0.0
    %342 = vmatpush.msra.mxu0 0.0
    %343 = vmatpush.msra.mxu0 0.0
    %344 = vmatpush.msra.mxu0 0.0
    %345 = vmatpush.msra.mxu0 0.0
    %346 = vmatpush.msra.mxu0 0.0
    %347 = vmatpush.msra.mxu0 0.0
    %348 = vmatpush.msra.mxu0 0.0
    %349 = vmatpush.msra.mxu0 0.0
    %350 = vmatpush.msra.mxu0 0.0
    %351 = vmatpush.msra.mxu0 0.0
    %352 = vmatpush.msra.mxu0 %v337
    %353 = vmatpush.msra.mxu0 %v336
    %354 = vmatmul.f32.gmra.mxu0 %v42
    %v355 = vpop.f32.mrf.mxu0
    %v356 = vadd.f32 0.0, %v355
    %357 = vdwg.mxu0
    %v359 = vsel %vm40, %v356, 0
    %361 = vmatpush.msra.mxu0 0.0
    %362 = vmatpush.msra.mxu0 0.0
    %363 = vmatpush.msra.mxu0 0.0
    %364 = vmatpush.msra.mxu0 0.0
    %365 = vmatpush.msra.mxu0 0.0
    %366 = vmatpush.msra.mxu0 0.0
    %367 = vmatpush.msra.mxu0 0.0
    %368 = vmatpush.msra.mxu0 0.0
    %369 = vmatpush.msra.mxu0 0.0
    %370 = vmatpush.msra.mxu0 0.0
    %371 = vmatpush.msra.mxu0 0.0
    %372 = vmatpush.msra.mxu0 0.0
    %373 = vmatpush.msra.mxu0 0.0
    %374 = vmatpush.msra.mxu0 0.0
    %375 = vmatpush.msra.mxu0 %v36
    %376 = vmatpush.msra.mxu0 %v35
    %377 = vmatmul.f32.gmra.mxu0 %v359
    %v378 = vpop.f32.mrf.mxu0
    %v379 = vadd.f32 0.0, %v378
    %380 = vdwg.mxu0
    %s381 = scalar_lea.vmem [#allocation7], 48
    %382 = vst.msk [vmem:[%s381] sm:$0xff] %vm87, %v379
    %s383 = scalar_lea.vmem [#allocation4], 112
    %s384 = scalar_lea.vmem %s383, %s33 [#allocation4]
    %v385 = vld [vmem:[%s384] sm:$0xff]
    %v386 = vld [vmem:[%s384 + $0x8] sm:$0xff]
    %387 = vmatpush.msra.mxu0 0.0
    %388 = vmatpush.msra.mxu0 0.0
    %389 = vmatpush.msra.mxu0 0.0
    %390 = vmatpush.msra.mxu0 0.0
    %391 = vmatpush.msra.mxu0 0.0
    %392 = vmatpush.msra.mxu0 0.0
    %393 = vmatpush.msra.mxu0 0.0
    %394 = vmatpush.msra.mxu0 0.0
    %395 = vmatpush.msra.mxu0 0.0
    %396 = vmatpush.msra.mxu0 0.0
    %397 = vmatpush.msra.mxu0 0.0
    %398 = vmatpush.msra.mxu0 0.0
    %399 = vmatpush.msra.mxu0 0.0
    %400 = vmatpush.msra.mxu0 0.0
    %401 = vmatpush.msra.mxu0 %v386
    %402 = vmatpush.msra.mxu0 %v385
    %403 = vmatmul.f32.gmra.mxu0 %v42
    %v404 = vpop.f32.mrf.mxu0
    %v405 = vadd.f32 0.0, %v404
    %406 = vdwg.mxu0
    %v408 = vsel %vm40, %v405, 0
    %410 = vmatpush.msra.mxu0 0.0
    %411 = vmatpush.msra.mxu0 0.0
    %412 = vmatpush.msra.mxu0 0.0
    %413 = vmatpush.msra.mxu0 0.0
    %414 = vmatpush.msra.mxu0 0.0
    %415 = vmatpush.msra.mxu0 0.0
    %416 = vmatpush.msra.mxu0 0.0
    %417 = vmatpush.msra.mxu0 0.0
    %418 = vmatpush.msra.mxu0 0.0
    %419 = vmatpush.msra.mxu0 0.0
    %420 = vmatpush.msra.mxu0 0.0
    %421 = vmatpush.msra.mxu0 0.0
    %422 = vmatpush.msra.mxu0 0.0
    %423 = vmatpush.msra.mxu0 0.0
    %424 = vmatpush.msra.mxu0 %v36
    %425 = vmatpush.msra.mxu0 %v35
    %426 = vmatmul.f32.gmra.mxu0 %v408
    %v427 = vpop.f32.mrf.mxu0
    %v428 = vadd.f32 0.0, %v427
    %429 = vdwg.mxu0
    %s430 = scalar_lea.vmem [#allocation7], 56
    %431 = vst.msk [vmem:[%s430] sm:$0xff] %vm87, %v428
    // Predicated region
    $region18: #{tpu_custom_call.1} parent=1 // pred_check
      _
    $region19: #{tpu_custom_call.1} parent=1 // pred_check_branch
      %433 = sbr.rel (0) target = $region21
    $region20: #{tpu_custom_call.1} parent=1 // pred_region
      %435 = vsyncadd [#allocation6], 0
      %s436 = sshll.u32 [#allocation7], 4
      %s437 = int_to_ptr.vmem [resolvable:$true] %s436
      %s438 = sshll.u32 %s4, 4
      %s439 = int_to_ptr.hbm [resolvable:$true] %s438
      %444 = dma.vmem_to_hbm [thread:$0]  %s437, 1024, %s439, [#allocation6], 128, 128, 8
    $region21: #{tpu_custom_call.1} parent=1 // pred_fallthru
      _
    // Predicated region
    $region22: #{tpu_custom_call.1} parent=1 // pred_check
      _
    $region23: #{tpu_custom_call.1} parent=1 // pred_check_branch
      %446 = sbr.rel (0) target = $region25
    $region24: #{tpu_custom_call.1} parent=1 // pred_region
      %448 = dma.done [#allocation6], 1024
    $region25: #{tpu_custom_call.1} parent=1 // pred_fallthru
      _
    %449 = vsyncpa [#allocation5], 1
    %450 = vsyncpa [#allocation6], 1

</llo_original>
